<compile_context>
chip_gen: v7x
topology: tpu7x:2x2x1
jax: 0.10.0
libtpu: 0.0.40
codegen_flags: <defaults>
</compile_context>

<pallas_src>
import functools

import jax
import jax.numpy as jnp
from jax import lax
from jax.experimental import pallas as pl
from jax.experimental.pallas import tpu as pltpu

EPS = 1e-5  # nn.InstanceNorm2d default eps (affine=False -> no scale/shift)


def residual_block_kernel(col_ref, row_ref, x_ref, w1_ref, w2_ref, o_ref, *,
                          H, W, compute_dtype):
    hw = H * W
    x = x_ref[0].astype(jnp.float32)                 # (C, H*W)

    col = col_ref[...]                               # (1, H*W) int32
    row = row_ref[...]
    left_edge = col == 0
    right_edge = col == W - 1
    top_edge = row == 0
    bot_edge = row == H - 1

    def conv3x3(h, w_ref):
        # h: (Cin, H*W).  3x3 conv with reflection pad 1, no bias (bias is a
        # per-channel constant that the following InstanceNorm cancels).
        h = h.astype(compute_dtype)
        r_l = pltpu.roll(h, 1, axis=1)               # value at (y, x-1)
        r_r = pltpu.roll(h, hw - 1, axis=1)          # value at (y, x+1)
        left = jnp.where(left_edge, r_r, r_l)        # reflect at x == 0
        right = jnp.where(right_edge, r_l, r_r)      # reflect at x == W-1
        # pack the 3 horizontal taps (kx = 0, 1, 2) along the contraction axis
        mid3 = jnp.concatenate([left, h, right], axis=0)   # (3*Cin, H*W)
        r_u = pltpu.roll(mid3, W, axis=1)            # values from row y-1
        r_d = pltpu.roll(mid3, hw - W, axis=1)       # values from row y+1
        up3 = jnp.where(top_edge, r_d, r_u)          # reflect at y == 0
        dn3 = jnp.where(bot_edge, r_u, r_d)          # reflect at y == H-1
        acc = jnp.dot(w_ref[0], up3, preferred_element_type=jnp.float32)
        acc += jnp.dot(w_ref[1], mid3, preferred_element_type=jnp.float32)
        acc += jnp.dot(w_ref[2], dn3, preferred_element_type=jnp.float32)
        return acc                                   # (Cout, H*W) f32

    def instance_norm(h):
        # single pass over h: per-channel (per-row) stats over the lane axis
        inv_n = 1.0 / hw
        mean = jnp.sum(h, axis=1, keepdims=True) * inv_n
        var = jnp.sum(h * h, axis=1, keepdims=True) * inv_n - mean * mean
        return (h - mean) * lax.rsqrt(var + EPS)

    h = jnp.maximum(instance_norm(conv3x3(x, w1_ref)), 0.0)   # conv1 + IN + ReLU
    h = instance_norm(conv3x3(h, w2_ref))                     # conv2 + IN
    o_ref[0] = (x + h).astype(o_ref.dtype)                    # residual add


def residual_block(x_nchw, w1, b1, w2, b2, compute_dtype=jnp.float32):
    """x_nchw: (N, C, H, W); w*: (C, C, 3, 3) PyTorch OIHW layout; b*: (C,).

    Biases are ignored: a per-channel constant added before an affine-free
    InstanceNorm has exactly zero effect on the output.
    compute_dtype=jnp.bfloat16 enables bf16 MXU operands on v6e/v7x (keep f32
    on v5e and loosen test tolerances if used).
    """
    del b1, b2
    N, C, H, W = x_nchw.shape
    assert H >= 2 and W >= 2, "reflection padding of 1 needs H, W >= 2"
    HW = H * W

    # Free reshape: NCHW stays NCHW, no layout round trip through HBM.
    x = x_nchw.reshape(N, C, HW).astype(jnp.float32)

    # Pack weights per kernel row: wk[ky][co, kx*Cin + ci] = w[co, ci, ky, kx]
    wk1 = jnp.transpose(w1, (2, 0, 3, 1)).reshape(3, C, 3 * C).astype(compute_dtype)
    wk2 = jnp.transpose(w2, (2, 0, 3, 1)).reshape(3, C, 3 * C).astype(compute_dtype)

    # Edge masks built once outside the kernel (avoids in-kernel int div/mod).
    pos = jnp.arange(HW, dtype=jnp.int32)
    col_ids = (pos % W).reshape(1, HW)
    row_ids = (pos // W).reshape(1, HW)

    kernel = functools.partial(residual_block_kernel, H=H, W=W,
                               compute_dtype=compute_dtype)

    # TODO(synk): for large H*W*C (whole image >> VMEM, e.g. v7x's 64 MiB), add
    # an H-tiling grid axis with a 1-row halo and a two-pass InstanceNorm.
    out = pl.pallas_call(
        kernel,
        out_shape=jax.ShapeDtypeStruct((N, C, HW), jnp.float32),
        grid_spec=pltpu.PrefetchScalarGridSpec(
            num_scalar_prefetch=0,
            grid=(N,),
            in_specs=[
                pl.BlockSpec((1, HW), lambda n: (0, 0)),           # col ids
                pl.BlockSpec((1, HW), lambda n: (0, 0)),           # row ids
                pl.BlockSpec((1, C, HW), lambda n: (n, 0, 0)),     # x
                pl.BlockSpec((3, C, 3 * C), lambda n: (0, 0, 0)),  # conv1 w
                pl.BlockSpec((3, C, 3 * C), lambda n: (0, 0, 0)),  # conv2 w
            ],
            out_specs=pl.BlockSpec((1, C, HW), lambda n: (n, 0, 0)),
        ),
        compiler_params=pltpu.CompilerParams(
            dimension_semantics=("parallel",)),
    )(col_ids, row_ids, x, wk1, wk2)

    return out.reshape(N, C, H, W)


def _reference(x_nchw, w1, b1, w2, b2):
    # Pure-JAX reference (same semantics as the PyTorch module, biases kept).
    def conv(x, w, b):
        xp = jnp.pad(x, ((0, 0), (0, 0), (1, 1), (1, 1)), mode="reflect")
        y = lax.conv_general_dilated(
            xp, w, window_strides=(1, 1), padding="VALID",
            dimension_numbers=("NCHW", "OIHW", "NCHW"))
        return y + b.reshape(1, -1, 1, 1)

    def inorm(h):
        m = jnp.mean(h, axis=(2, 3), keepdims=True)
        v = jnp.mean((h - m) ** 2, axis=(2, 3), keepdims=True)
        return (h - m) * lax.rsqrt(v + EPS)

    h = conv(x_nchw, w1, b1)
    h = jnp.maximum(inorm(h), 0.0)
    h = conv(h, w2, b2)
    h = inorm(h)
    return x_nchw + h


if __name__ == "__main__":
    N, C, H, W = 2, 4, 16, 16
    key = jax.random.PRNGKey(0)
    kx, k1, k2, k3, k4 = jax.random.split(key, 5)

    x = jax.random.normal(kx, (N, C, H, W), jnp.float32)
    w1 = jax.random.normal(k1, (C, C, 3, 3), jnp.float32) * 0.1
    b1 = jax.random.normal(k2, (C,), jnp.float32) * 0.1
    w2 = jax.random.normal(k3, (C, C, 3, 3), jnp.float32) * 0.1
    b2 = jax.random.normal(k4, (C,), jnp.float32) * 0.1

    out = jax.block_until_ready(residual_block(x, w1, b1, w2, b2))
    ref = jax.block_until_ready(_reference(x, w1, b1, w2, b2))

    assert out.shape == (N, C, H, W)
    assert jnp.max(jnp.abs(out - ref)) < 1e-4

    print("KERNEL_OK")
</pallas_src>

<mosaic_0001>
module attributes {stable_mosaic.version = 11 : i64} {
  func.func @residual_block_kernel(%arg0: i32, %arg1: memref<1x256xi32, #tpu.memory_space<vmem>>, %arg2: memref<1x256xi32, #tpu.memory_space<vmem>>, %arg3: memref<1x4x256xf32, #tpu.memory_space<vmem>>, %arg4: memref<3x4x12xf32, #tpu.memory_space<vmem>>, %arg5: memref<3x4x12xf32, #tpu.memory_space<vmem>>, %arg6: memref<1x4x256xf32, #tpu.memory_space<vmem>>) attributes {dimension_semantics = [#tpu.dimension_semantics<parallel>], iteration_bounds = array<i64: 2>, scalar_prefetch = 0 : i64, scratch_operands = 0 : i64, tpu.core_type = #tpu.core_type<tc>, window_params = [{pipeline_mode = #tpu.pipeline_mode<synchronous>, transform_indices = @transform_0, window_bounds = array<i64: 1, 256>}, {pipeline_mode = #tpu.pipeline_mode<synchronous>, transform_indices = @transform_1, window_bounds = array<i64: 1, 256>}, {transform_indices = @transform_2, window_bounds = array<i64: 1, 4, 256>}, {pipeline_mode = #tpu.pipeline_mode<synchronous>, transform_indices = @transform_3, window_bounds = array<i64: 3, 4, 12>}, {pipeline_mode = #tpu.pipeline_mode<synchronous>, transform_indices = @transform_4, window_bounds = array<i64: 3, 4, 12>}, {transform_indices = @transform_5, window_bounds = array<i64: 1, 4, 256>}]} {
    %c0 = arith.constant 0 : index
    %c0_0 = arith.constant 0 : index
    %c0_1 = arith.constant 0 : index
    %0 = vector.load %arg3[%c0, %c0_0, %c0_1] : memref<1x4x256xf32, #tpu.memory_space<vmem>>, vector<1x4x256xf32>
    %1 = vector.shape_cast %0 : vector<1x4x256xf32> to vector<4x256xf32>
    %c0_2 = arith.constant 0 : index
    %c0_3 = arith.constant 0 : index
    %2 = vector.load %arg1[%c0_2, %c0_3] : memref<1x256xi32, #tpu.memory_space<vmem>>, vector<1x256xi32>
    %c0_4 = arith.constant 0 : index
    %c0_5 = arith.constant 0 : index
    %3 = vector.load %arg2[%c0_4, %c0_5] : memref<1x256xi32, #tpu.memory_space<vmem>>, vector<1x256xi32>
    %c0_i32 = arith.constant 0 : i32
    %4 = vector.broadcast %c0_i32 : i32 to vector<1x256xi32>
    %5 = arith.cmpi eq, %2, %4 : vector<1x256xi32>
    %c15_i32 = arith.constant 15 : i32
    %6 = vector.broadcast %c15_i32 : i32 to vector<1x256xi32>
    %7 = arith.cmpi eq, %2, %6 : vector<1x256xi32>
    %c0_i32_6 = arith.constant 0 : i32
    %8 = vector.broadcast %c0_i32_6 : i32 to vector<1x256xi32>
    %9 = arith.cmpi eq, %3, %8 : vector<1x256xi32>
    %c15_i32_7 = arith.constant 15 : i32
    %10 = vector.broadcast %c15_i32_7 : i32 to vector<1x256xi32>
    %11 = arith.cmpi eq, %3, %10 : vector<1x256xi32>
    %c1_i32 = arith.constant 1 : i32
    %12 = tpu.dynamic_rotate %1 by %c1_i32 dim 1 : vector<4x256xf32>, i32 -> vector<4x256xf32>
    %c255_i32 = arith.constant 255 : i32
    %13 = tpu.dynamic_rotate %1 by %c255_i32 dim 1 : vector<4x256xf32>, i32 -> vector<4x256xf32>
    %14 = vector.shape_cast %5 : vector<1x256xi1> to vector<1x256xi1>
    %15 = vector.broadcast %14 : vector<1x256xi1> to vector<4x256xi1>
    %16 = arith.select %15, %13, %12 : vector<4x256xi1>, vector<4x256xf32>
    %17 = vector.shape_cast %7 : vector<1x256xi1> to vector<1x256xi1>
    %18 = vector.broadcast %17 : vector<1x256xi1> to vector<4x256xi1>
    %19 = arith.select %18, %12, %13 : vector<4x256xi1>, vector<4x256xf32>
    %20 = tpu.concatenate %16, %1, %19 in 0 : vector<4x256xf32>, vector<4x256xf32>, vector<4x256xf32> -> vector<12x256xf32>
    %c16_i32 = arith.constant 16 : i32
    %21 = tpu.dynamic_rotate %20 by %c16_i32 dim 1 : vector<12x256xf32>, i32 -> vector<12x256xf32>
    %c240_i32 = arith.constant 240 : i32
    %22 = tpu.dynamic_rotate %20 by %c240_i32 dim 1 : vector<12x256xf32>, i32 -> vector<12x256xf32>
    %23 = vector.shape_cast %9 : vector<1x256xi1> to vector<1x256xi1>
    %24 = vector.broadcast %23 : vector<1x256xi1> to vector<12x256xi1>
    %25 = arith.select %24, %22, %21 : vector<12x256xi1>, vector<12x256xf32>
    %26 = vector.shape_cast %11 : vector<1x256xi1> to vector<1x256xi1>
    %27 = vector.broadcast %26 : vector<1x256xi1> to vector<12x256xi1>
    %28 = arith.select %27, %21, %22 : vector<12x256xi1>, vector<12x256xf32>
    %c0_8 = arith.constant 0 : index
    %c0_9 = arith.constant 0 : index
    %c0_10 = arith.constant 0 : index
    %29 = vector.load %arg4[%c0_8, %c0_9, %c0_10] : memref<3x4x12xf32, #tpu.memory_space<vmem>>, vector<1x4x12xf32>
    %30 = vector.shape_cast %29 : vector<1x4x12xf32> to vector<4x12xf32>
    %cst = arith.constant dense<0.000000e+00> : vector<4x256xf32>
    %31 = tpu.matmul %30, %25, %cst {dimension_numbers = #tpu.dot_dimension_numbers<[1], [0], [0], [1], [0, 0, 1, 1], [], []>} : vector<4x12xf32>, vector<12x256xf32>, vector<4x256xf32> -> vector<4x256xf32>
    %c1 = arith.constant 1 : index
    %c0_11 = arith.constant 0 : index
    %c0_12 = arith.constant 0 : index
    %32 = vector.load %arg4[%c1, %c0_11, %c0_12] : memref<3x4x12xf32, #tpu.memory_space<vmem>>, vector<1x4x12xf32>
    %33 = vector.shape_cast %32 : vector<1x4x12xf32> to vector<4x12xf32>
    %cst_13 = arith.constant dense<0.000000e+00> : vector<4x256xf32>
    %34 = tpu.matmul %33, %20, %cst_13 {dimension_numbers = #tpu.dot_dimension_numbers<[1], [0], [0], [1], [0, 0, 1, 1], [], []>} : vector<4x12xf32>, vector<12x256xf32>, vector<4x256xf32> -> vector<4x256xf32>
    %35 = arith.addf %31, %34 : vector<4x256xf32>
    %c2 = arith.constant 2 : index
    %c0_14 = arith.constant 0 : index
    %c0_15 = arith.constant 0 : index
    %36 = vector.load %arg4[%c2, %c0_14, %c0_15] : memref<3x4x12xf32, #tpu.memory_space<vmem>>, vector<1x4x12xf32>
    %37 = vector.shape_cast %36 : vector<1x4x12xf32> to vector<4x12xf32>
    %cst_16 = arith.constant dense<0.000000e+00> : vector<4x256xf32>
    %38 = tpu.matmul %37, %28, %cst_16 {dimension_numbers = #tpu.dot_dimension_numbers<[1], [0], [0], [1], [0, 0, 1, 1], [], []>} : vector<4x12xf32>, vector<12x256xf32>, vector<4x256xf32> -> vector<4x256xf32>
    %39 = arith.addf %35, %38 : vector<4x256xf32>
    %cst_17 = arith.constant dense<0.000000e+00> : vector<4xf32>
    %40 = vector.multi_reduction <add>, %39, %cst_17 [1] : vector<4x256xf32> to vector<4xf32>
    %41 = vector.shape_cast %40 : vector<4xf32> to vector<4x1xf32>
    %cst_18 = arith.constant 3.906250e-03 : f32
    %42 = vector.broadcast %cst_18 : f32 to vector<4x1xf32>
    %43 = arith.mulf %41, %42 : vector<4x1xf32>
    %44 = arith.mulf %39, %39 : vector<4x256xf32>
    %cst_19 = arith.constant dense<0.000000e+00> : vector<4xf32>
    %45 = vector.multi_reduction <add>, %44, %cst_19 [1] : vector<4x256xf32> to vector<4xf32>
    %46 = vector.shape_cast %45 : vector<4xf32> to vector<4x1xf32>
    %cst_20 = arith.constant 3.906250e-03 : f32
    %47 = vector.broadcast %cst_20 : f32 to vector<4x1xf32>
    %48 = arith.mulf %46, %47 : vector<4x1xf32>
    %49 = arith.mulf %43, %43 : vector<4x1xf32>
    %50 = arith.subf %48, %49 : vector<4x1xf32>
    %51 = vector.broadcast %43 : vector<4x1xf32> to vector<4x256xf32>
    %52 = arith.subf %39, %51 : vector<4x256xf32>
    %cst_21 = arith.constant 9.99999974E-6 : f32
    %53 = vector.broadcast %cst_21 : f32 to vector<4x1xf32>
    %54 = arith.addf %50, %53 : vector<4x1xf32>
    %55 = math.rsqrt %54 : vector<4x1xf32>
    %56 = vector.broadcast %55 : vector<4x1xf32> to vector<4x256xf32>
    %57 = arith.mulf %52, %56 : vector<4x256xf32>
    %cst_22 = arith.constant 0.000000e+00 : f32
    %58 = vector.broadcast %cst_22 : f32 to vector<4x256xf32>
    %59 = arith.maximumf %57, %58 : vector<4x256xf32>
    %c1_i32_23 = arith.constant 1 : i32
    %60 = tpu.dynamic_rotate %59 by %c1_i32_23 dim 1 : vector<4x256xf32>, i32 -> vector<4x256xf32>
    %c255_i32_24 = arith.constant 255 : i32
    %61 = tpu.dynamic_rotate %59 by %c255_i32_24 dim 1 : vector<4x256xf32>, i32 -> vector<4x256xf32>
    %62 = vector.shape_cast %5 : vector<1x256xi1> to vector<1x256xi1>
    %63 = vector.broadcast %62 : vector<1x256xi1> to vector<4x256xi1>
    %64 = arith.select %63, %61, %60 : vector<4x256xi1>, vector<4x256xf32>
    %65 = vector.shape_cast %7 : vector<1x256xi1> to vector<1x256xi1>
    %66 = vector.broadcast %65 : vector<1x256xi1> to vector<4x256xi1>
    %67 = arith.select %66, %60, %61 : vector<4x256xi1>, vector<4x256xf32>
    %68 = tpu.concatenate %64, %59, %67 in 0 : vector<4x256xf32>, vector<4x256xf32>, vector<4x256xf32> -> vector<12x256xf32>
    %c16_i32_25 = arith.constant 16 : i32
    %69 = tpu.dynamic_rotate %68 by %c16_i32_25 dim 1 : vector<12x256xf32>, i32 -> vector<12x256xf32>
    %c240_i32_26 = arith.constant 240 : i32
    %70 = tpu.dynamic_rotate %68 by %c240_i32_26 dim 1 : vector<12x256xf32>, i32 -> vector<12x256xf32>
    %71 = vector.shape_cast %9 : vector<1x256xi1> to vector<1x256xi1>
    %72 = vector.broadcast %71 : vector<1x256xi1> to vector<12x256xi1>
    %73 = arith.select %72, %70, %69 : vector<12x256xi1>, vector<12x256xf32>
    %74 = vector.shape_cast %11 : vector<1x256xi1> to vector<1x256xi1>
    %75 = vector.broadcast %74 : vector<1x256xi1> to vector<12x256xi1>
    %76 = arith.select %75, %69, %70 : vector<12x256xi1>, vector<12x256xf32>
    %c0_27 = arith.constant 0 : index
    %c0_28 = arith.constant 0 : index
    %c0_29 = arith.constant 0 : index
    %77 = vector.load %arg5[%c0_27, %c0_28, %c0_29] : memref<3x4x12xf32, #tpu.memory_space<vmem>>, vector<1x4x12xf32>
    %78 = vector.shape_cast %77 : vector<1x4x12xf32> to vector<4x12xf32>
    %cst_30 = arith.constant dense<0.000000e+00> : vector<4x256xf32>
    %79 = tpu.matmul %78, %73, %cst_30 {dimension_numbers = #tpu.dot_dimension_numbers<[1], [0], [0], [1], [0, 0, 1, 1], [], []>} : vector<4x12xf32>, vector<12x256xf32>, vector<4x256xf32> -> vector<4x256xf32>
    %c1_31 = arith.constant 1 : index
    %c0_32 = arith.constant 0 : index
    %c0_33 = arith.constant 0 : index
    %80 = vector.load %arg5[%c1_31, %c0_32, %c0_33] : memref<3x4x12xf32, #tpu.memory_space<vmem>>, vector<1x4x12xf32>
    %81 = vector.shape_cast %80 : vector<1x4x12xf32> to vector<4x12xf32>
    %cst_34 = arith.constant dense<0.000000e+00> : vector<4x256xf32>
    %82 = tpu.matmul %81, %68, %cst_34 {dimension_numbers = #tpu.dot_dimension_numbers<[1], [0], [0], [1], [0, 0, 1, 1], [], []>} : vector<4x12xf32>, vector<12x256xf32>, vector<4x256xf32> -> vector<4x256xf32>
    %83 = arith.addf %79, %82 : vector<4x256xf32>
    %c2_35 = arith.constant 2 : index
    %c0_36 = arith.constant 0 : index
    %c0_37 = arith.constant 0 : index
    %84 = vector.load %arg5[%c2_35, %c0_36, %c0_37] : memref<3x4x12xf32, #tpu.memory_space<vmem>>, vector<1x4x12xf32>
    %85 = vector.shape_cast %84 : vector<1x4x12xf32> to vector<4x12xf32>
    %cst_38 = arith.constant dense<0.000000e+00> : vector<4x256xf32>
    %86 = tpu.matmul %85, %76, %cst_38 {dimension_numbers = #tpu.dot_dimension_numbers<[1], [0], [0], [1], [0, 0, 1, 1], [], []>} : vector<4x12xf32>, vector<12x256xf32>, vector<4x256xf32> -> vector<4x256xf32>
    %87 = arith.addf %83, %86 : vector<4x256xf32>
    %cst_39 = arith.constant dense<0.000000e+00> : vector<4xf32>
    %88 = vector.multi_reduction <add>, %87, %cst_39 [1] : vector<4x256xf32> to vector<4xf32>
    %89 = vector.shape_cast %88 : vector<4xf32> to vector<4x1xf32>
    %cst_40 = arith.constant 3.906250e-03 : f32
    %90 = vector.broadcast %cst_40 : f32 to vector<4x1xf32>
    %91 = arith.mulf %89, %90 : vector<4x1xf32>
    %92 = arith.mulf %87, %87 : vector<4x256xf32>
    %cst_41 = arith.constant dense<0.000000e+00> : vector<4xf32>
    %93 = vector.multi_reduction <add>, %92, %cst_41 [1] : vector<4x256xf32> to vector<4xf32>
    %94 = vector.shape_cast %93 : vector<4xf32> to vector<4x1xf32>
    %cst_42 = arith.constant 3.906250e-03 : f32
    %95 = vector.broadcast %cst_42 : f32 to vector<4x1xf32>
    %96 = arith.mulf %94, %95 : vector<4x1xf32>
    %97 = arith.mulf %91, %91 : vector<4x1xf32>
    %98 = arith.subf %96, %97 : vector<4x1xf32>
    %99 = vector.broadcast %91 : vector<4x1xf32> to vector<4x256xf32>
    %100 = arith.subf %87, %99 : vector<4x256xf32>
    %cst_43 = arith.constant 9.99999974E-6 : f32
    %101 = vector.broadcast %cst_43 : f32 to vector<4x1xf32>
    %102 = arith.addf %98, %101 : vector<4x1xf32>
    %103 = math.rsqrt %102 : vector<4x1xf32>
    %104 = vector.broadcast %103 : vector<4x1xf32> to vector<4x256xf32>
    %105 = arith.mulf %100, %104 : vector<4x256xf32>
    %106 = arith.addf %1, %105 : vector<4x256xf32>
    %c0_44 = arith.constant 0 : index
    %c0_45 = arith.constant 0 : index
    %c0_46 = arith.constant 0 : index
    %107 = vector.load %arg6[%c0_44, %c0_45, %c0_46] : memref<1x4x256xf32, #tpu.memory_space<vmem>>, vector<1x4x256xf32>
    %108 = vector.shape_cast %107 : vector<1x4x256xf32> to vector<4x256xf32>
    %109 = vector.shape_cast %106 : vector<4x256xf32> to vector<1x4x256xf32>
    tpu.vector_store %arg6[%c0_44, %c0_45, %c0_46], %109 {strides = array<i32>} : memref<1x4x256xf32, #tpu.memory_space<vmem>>, vector<1x4x256xf32>,
    return
  }
  func.func @transform_0(%arg0: i32) -> (i32, i32) {
    %c0_i32 = arith.constant 0 : i32
    %c0_i32_0 = arith.constant 0 : i32
    %c0_i32_1 = arith.constant 0 : i32
    return %c0_i32, %c0_i32_0 : i32, i32
  }
  func.func @transform_1(%arg0: i32) -> (i32, i32) {
    %c0_i32 = arith.constant 0 : i32
    %c0_i32_0 = arith.constant 0 : i32
    %c0_i32_1 = arith.constant 0 : i32
    return %c0_i32, %c0_i32_0 : i32, i32
  }
  func.func @transform_2(%arg0: i32) -> (i32, i32, i32) {
    %c0_i32 = arith.constant 0 : i32
    %c0_i32_0 = arith.constant 0 : i32
    %c0_i32_1 = arith.constant 0 : i32
    return %arg0, %c0_i32, %c0_i32_0 : i32, i32, i32
  }
  func.func @transform_3(%arg0: i32) -> (i32, i32, i32) {
    %c0_i32 = arith.constant 0 : i32
    %c0_i32_0 = arith.constant 0 : i32
    %c0_i32_1 = arith.constant 0 : i32
    %c0_i32_2 = arith.constant 0 : i32
    return %c0_i32, %c0_i32_0, %c0_i32_1 : i32, i32, i32
  }
  func.func @transform_4(%arg0: i32) -> (i32, i32, i32) {
    %c0_i32 = arith.constant 0 : i32
    %c0_i32_0 = arith.constant 0 : i32
    %c0_i32_1 = arith.constant 0 : i32
    %c0_i32_2 = arith.constant 0 : i32
    return %c0_i32, %c0_i32_0, %c0_i32_1 : i32, i32, i32
  }
  func.func @transform_5(%arg0: i32) -> (i32, i32, i32) {
    %c0_i32 = arith.constant 0 : i32
    %c0_i32_0 = arith.constant 0 : i32
    %c0_i32_1 = arith.constant 0 : i32
    return %arg0, %c0_i32, %c0_i32_0 : i32, i32, i32
  }
}

</mosaic_0001>

<llo_original>
// kernel: tpu_custom_call.1
$region0: #{tpu_custom_call.1}
  #allocation0 [shape = 'u32[]', space=smem, size = 0x4, offset = 0x4, fixed_abs, tag = 'smem constant byte address 0x4 - core index']
  #allocation1 [shape = 'u32[144,128]{1,0:T(1,128)}', space=vmem, size = 0x12000, scoped, tag = 'internal scratch']
  %s0 = inlined_call_operand.hbm [shape: s32[1,256], index: 0, kind: input, shape index: {}]
  %s1 = inlined_call_operand.vmem [shape: s32[1,256], index: 1, kind: input, shape index: {}]
  %s2 = inlined_call_operand.hbm [shape: f32[2,4,256], index: 2, kind: input, shape index: {}]
  %s3 = inlined_call_operand.hbm [shape: f32[3,4,12], index: 3, kind: input, shape index: {}]
  %s4 = inlined_call_operand.vmem [shape: f32[3,4,12], index: 4, kind: input, shape index: {}]
  %s5 = inlined_call_operand.hbm [shape: f32[2,4,256], index: 5, kind: output, shape index: {}]
  %s6 = sld [smem:[#allocation0]]
  $region65: #{tpu_custom_call.1} parent=0
    _
  %s8 = ssub.s32 1, %s6
  %s9 = scalar_select 0, %s8, %s6
  $region1: #{tpu_custom_call.1} parent=0
    #allocation2 [shape = 'u8[1024]{0}', space=vmem, size = 0x400, scoped, tag = 'input window, operand 0, single buffered']
    #allocation3 [shape = 's32[2]{0}', space=sflag, size = 0x8, scoped, tag = 'scoped memory for tpu_custom_call.1']
    #allocation4 [shape = 's32[2]{0}', space=sflag, size = 0x8, scoped, tag = 'scoped memory for tpu_custom_call.1']
    #allocation5 [shape = 'u8[8192]{0}', space=vmem, size = 0x2000, scoped, tag = 'input window, operand 2']
    #allocation6 [shape = 's32[2]{0}', space=sflag, size = 0x8, scoped, tag = 'scoped memory for tpu_custom_call.1']
    #allocation7 [shape = 'u8[6144]{0}', space=vmem, size = 0x1800, scoped, tag = 'input window, operand 3, single buffered']
    #allocation8 [shape = 'u8[8192]{0}', space=vmem, size = 0x2000, scoped, tag = 'output window, operand 0']
    %10 = vsyncpa [#allocation3], 0
    %11 = vsyncpa [#allocation6], 0
    %s12 = scalar_lea.sflag [#allocation6], 1
    %13 = vsyncpa %s12, 0
    %14 = vsyncpa [#allocation4], 0
    %s15 = scalar_lea.sflag [#allocation4], 1
    %16 = vsyncpa %s15, 0
    loop: start=0, step=1, limit=4
    $region2: #{tpu_custom_call.1} parent=1 // loop_pre_header
      _
    $region3: #{tpu_custom_call.1} parent=1 // loop_header
      %s18 = sphi 0, %s22
      %p19 = scmp.ge.s32.totalorder %s18, 4
      %s26 = sphi 0, %s26
      %s28 = sphi 0, %s26
      %s29 = sphi 0, %s28
      %s43 = sphi 0, %s29
      %s47 = sphi 0, %s47
      %s49 = sphi 0, %s47
      %s50 = sphi 0, %s49
      %s64 = sphi 0, %s50
      %s70 = sphi 0, %s72
      %s73 = sphi 0, %s70
      %s74 = sphi 0, %s73
      %s90 = sphi 0, %s74
      %s94 = sphi 0, %s94
      %s96 = sphi 0, %s94
      %s97 = sphi 0, %s96
      %s111 = sphi 0, %s97
      %s115 = sphi 0, %s115
      %s117 = sphi 0, %s115
      %s118 = sphi 0, %s117
      %s132 = sphi 0, %s118
      %s138 = sphi 0, %s140
      %s141 = sphi 0, %s138
      %s142 = sphi 0, %s141
      %s158 = sphi 0, %s142
    $region4: #{tpu_custom_call.1} parent=1 // loop_header_branch
      %21 = sbr.rel (%p19) target = $region8
    $region5: #{tpu_custom_call.1} parent=1 // loop_body
      %s23 = ssub.s32 %s18, 1
      %s24 = ssub.s32 %s18, 2
      %s25 = sadd.s32 %s18, 1
      %s27 = sadd.s32 %s26, 1
      %p30 = scmp.eq.s32.totalorder %s18, 1
      %p31 = scmp.ne.s32.totalorder %s26, %s28
      %p32 = scmp.eq.s32.totalorder %s18, 0
      %p33 = por %p31, %p32
      %p34 = scmp.ne.s32.totalorder %s26, %s28
      %p35 = scmp.eq.s32.totalorder %s23, 1
      %p36 = por %p34, %p35
      %p37 = scmp.ne.s32.totalorder %s28, %s29
      %p38 = scmp.eq.s32.totalorder %s23, 0
      %p39 = por %p37, %p38
      %p40 = scmp.ne.s32.totalorder %s28, %s29
      %p41 = scmp.eq.s32.totalorder %s24, 1
      %p42 = por %p40, %p41
      %p44 = scmp.ne.s32.totalorder %s29, %s43
      %p45 = scmp.eq.s32.totalorder %s24, 0
      %p46 = por %p44, %p45
      %s48 = sadd.s32 %s47, 1
      %p51 = scmp.eq.s32.totalorder %s18, 1
      %p52 = scmp.ne.s32.totalorder %s47, %s49
      %p53 = scmp.eq.s32.totalorder %s18, 0
      %p54 = por %p52, %p53
      %p55 = scmp.ne.s32.totalorder %s47, %s49
      %p56 = scmp.eq.s32.totalorder %s23, 1
      %p57 = por %p55, %p56
      %p58 = scmp.ne.s32.totalorder %s49, %s50
      %p59 = scmp.eq.s32.totalorder %s23, 0
      %p60 = por %p58, %p59
      %p61 = scmp.ne.s32.totalorder %s49, %s50
      %p62 = scmp.eq.s32.totalorder %s24, 1
      %p63 = por %p61, %p62
      %p65 = scmp.ne.s32.totalorder %s50, %s64
      %p66 = scmp.eq.s32.totalorder %s24, 0
      %p67 = por %p65, %p66
      %s68 = ssub.s32 %s18, %s25
      %p69 = scmp.eq.s32.totalorder %s68, 0
      %s71 = sadd.s32 %s70, 1
      %s72 = scalar_select %p69, %s70, %s71
      %p75 = pneg %p69
      %p76 = scmp.eq.s32.totalorder %s18, 1
      %p77 = por %p75, %p76
      %p78 = scmp.ne.s32.totalorder %s70, %s73
      %p79 = scmp.eq.s32.totalorder %s18, 0
      %p80 = por %p78, %p79
      %p81 = scmp.ne.s32.totalorder %s70, %s73
      %p82 = scmp.eq.s32.totalorder %s23, 1
      %p83 = por %p81, %p82
      %p84 = scmp.ne.s32.totalorder %s73, %s74
      %p85 = scmp.eq.s32.totalorder %s23, 0
      %p86 = por %p84, %p85
      %p87 = scmp.ne.s32.totalorder %s73, %s74
      %p88 = scmp.eq.s32.totalorder %s24, 1
      %p89 = por %p87, %p88
      %p91 = scmp.ne.s32.totalorder %s74, %s90
      %p92 = scmp.eq.s32.totalorder %s24, 0
      %p93 = por %p91, %p92
      %s95 = sadd.s32 %s94, 1
      %p98 = scmp.eq.s32.totalorder %s18, 1
      %p99 = scmp.ne.s32.totalorder %s94, %s96
      %p100 = scmp.eq.s32.totalorder %s18, 0
      %p101 = por %p99, %p100
      %p102 = scmp.ne.s32.totalorder %s94, %s96
      %p103 = scmp.eq.s32.totalorder %s23, 1
      %p104 = por %p102, %p103
      %p105 = scmp.ne.s32.totalorder %s96, %s97
      %p106 = scmp.eq.s32.totalorder %s23, 0
      %p107 = por %p105, %p106
      %p108 = scmp.ne.s32.totalorder %s96, %s97
      %p109 = scmp.eq.s32.totalorder %s24, 1
      %p110 = por %p108, %p109
      %p112 = scmp.ne.s32.totalorder %s97, %s111
      %p113 = scmp.eq.s32.totalorder %s24, 0
      %p114 = por %p112, %p113
      %s116 = sadd.s32 %s115, 1
      %p119 = scmp.eq.s32.totalorder %s18, 1
      %p120 = scmp.ne.s32.totalorder %s115, %s117
      %p121 = scmp.eq.s32.totalorder %s18, 0
      %p122 = por %p120, %p121
      %p123 = scmp.ne.s32.totalorder %s115, %s117
      %p124 = scmp.eq.s32.totalorder %s23, 1
      %p125 = por %p123, %p124
      %p126 = scmp.ne.s32.totalorder %s117, %s118
      %p127 = scmp.eq.s32.totalorder %s23, 0
      %p128 = por %p126, %p127
      %p129 = scmp.ne.s32.totalorder %s117, %s118
      %p130 = scmp.eq.s32.totalorder %s24, 1
      %p131 = por %p129, %p130
      %p133 = scmp.ne.s32.totalorder %s118, %s132
      %p134 = scmp.eq.s32.totalorder %s24, 0
      %p135 = por %p133, %p134
      %s136 = ssub.s32 %s18, %s25
      %p137 = scmp.eq.s32.totalorder %s136, 0
      %s139 = sadd.s32 %s138, 1
      %s140 = scalar_select %p137, %s138, %s139
      %p143 = pneg %p137
      %p144 = scmp.eq.s32.totalorder %s18, 1
      %p145 = por %p143, %p144
      %p146 = scmp.ne.s32.totalorder %s138, %s141
      %p147 = scmp.eq.s32.totalorder %s18, 0
      %p148 = por %p146, %p147
      %p149 = scmp.ne.s32.totalorder %s138, %s141
      %p150 = scmp.eq.s32.totalorder %s23, 1
      %p151 = por %p149, %p150
      %p152 = scmp.ne.s32.totalorder %s141, %s142
      %p153 = scmp.eq.s32.totalorder %s23, 0
      %p154 = por %p152, %p153
      %p155 = scmp.ne.s32.totalorder %s141, %s142
      %p156 = scmp.eq.s32.totalorder %s24, 1
      %p157 = por %p155, %p156
      %p159 = scmp.ne.s32.totalorder %s142, %s158
      %p160 = scmp.eq.s32.totalorder %s24, 0
      %p161 = por %p159, %p160
      %p162 = scmp.le.s32.totalorder 1, %s18
      %p163 = scmp.lt.s32.totalorder %s18, 3
      %p164 = pnand %p162, %p163
      %p165 = pneg %p164
      // Predicated region
      $region9: #{tpu_custom_call.1} parent=5 // pred_check
        _
      $region10: #{tpu_custom_call.1} parent=5 // pred_check_branch
        %167 = sbr.rel (%p164) target = $region12
      $region11: #{tpu_custom_call.1} parent=5 // pred_region
        %s168 = ssub.s32 %s18, 1
        // Predicated region
        $region13: #{tpu_custom_call.1} parent=11 // pred_check
          %p169 = pneg %p39
        $region14: #{tpu_custom_call.1} parent=11 // pred_check_branch
          %171 = sbr.rel (%p169) target = $region16
        $region15: #{tpu_custom_call.1} parent=11 // pred_region
          %s173 = ssub.s32 32, 32
          %174 = vsyncadd [#allocation3], %s173
          %s176 = sshll.u32 [#allocation2], 4
          %s177 = int_to_ptr.vmem [resolvable:$true] %s176
          %179 = dma.hbm_to_vmem [thread:$0]  %s0, 32, %s177, [#allocation3]
        $region16: #{tpu_custom_call.1} parent=11 // pred_fallthru
          _
        // Predicated region
        $region17: #{tpu_custom_call.1} parent=11 // pred_check
          %p180 = pneg %p60
        $region18: #{tpu_custom_call.1} parent=11 // pred_check_branch
          %182 = sbr.rel (%p180) target = $region20
        $region19: #{tpu_custom_call.1} parent=11 // pred_region
          _
        $region20: #{tpu_custom_call.1} parent=11 // pred_fallthru
          _
        // Predicated region
        $region21: #{tpu_custom_call.1} parent=11 // pred_check
          %p183 = pneg %p107
        $region22: #{tpu_custom_call.1} parent=11 // pred_check_branch
          %185 = sbr.rel (%p183) target = $region24
        $region23: #{tpu_custom_call.1} parent=11 // pred_region
          %s187 = ssub.s32 192, 192
          %188 = vsyncadd [#allocation6], %s187
          %s189 = sshll.u32 [#allocation7], 4
          %s190 = int_to_ptr.vmem [resolvable:$true] %s189
          %195 = dma.hbm_to_vmem [thread:$0]  %s3, 192, %s190, [#allocation6], 64, 64, 4
        $region24: #{tpu_custom_call.1} parent=11 // pred_fallthru
          _
        // Predicated region
        $region25: #{tpu_custom_call.1} parent=11 // pred_check
          %p196 = pneg %p128
        $region26: #{tpu_custom_call.1} parent=11 // pred_check_branch
          %198 = sbr.rel (%p196) target = $region28
        $region27: #{tpu_custom_call.1} parent=11 // pred_region
          _
        $region28: #{tpu_custom_call.1} parent=11 // pred_fallthru
          _
      $region12: #{tpu_custom_call.1} parent=5 // pred_fallthru
        _
      %p199 = scmp.lt.s32.totalorder %s18, 2
      // Predicated region
      $region29: #{tpu_custom_call.1} parent=5 // pred_check
        %p200 = pneg %p199
      $region30: #{tpu_custom_call.1} parent=5 // pred_check_branch
        %202 = sbr.rel (%p200) target = $region32
      $region31: #{tpu_custom_call.1} parent=5 // pred_region
        // Predicated region
        $region33: #{tpu_custom_call.1} parent=31 // pred_check
          %p203 = pneg %p80
        $region34: #{tpu_custom_call.1} parent=31 // pred_check_branch
          %205 = sbr.rel (%p203) target = $region36
        $region35: #{tpu_custom_call.1} parent=31 // pred_region
          %s206 = sand.u32 %s18, 1
          %s207 = scalar_lea.sflag [#allocation6], %s206
          %s208 = sand.u32 %s70, 1
          %s209 = smul.addr %s208, 8
          %s210 = scalar_lea.vmem [#allocation5], %s209
          %s212 = ssub.s32 128, 128
          %213 = vsyncadd %s207, %s212
          %s214 = smul.addr %s18, 2
          %s215 = smul.addr %s214, 64
          %s216 = scalar_lea.hbm %s2, %s215
          %s218 = sshll.u32 %s210, 4
          %s219 = int_to_ptr.vmem [resolvable:$true] %s218
          %221 = dma.hbm_to_vmem [thread:$0]  %s216, 128, %s219, %s207
        $region36: #{tpu_custom_call.1} parent=31 // pred_fallthru
          _
      $region32: #{tpu_custom_call.1} parent=5 // pred_fallthru
        _
      %p222 = scmp.le.s32.totalorder 1, %s18
      %p223 = scmp.lt.s32.totalorder %s18, 3
      %p224 = pnand %p222, %p223
      %p225 = pneg %p224
      // Predicated region
      $region37: #{tpu_custom_call.1} parent=5 // pred_check
        _
      $region38: #{tpu_custom_call.1} parent=5 // pred_check_branch
        %227 = sbr.rel (%p224) target = $region40
      $region39: #{tpu_custom_call.1} parent=5 // pred_region
        %s228 = ssub.s32 %s18, 1
        // Predicated region
        $region41: #{tpu_custom_call.1} parent=39 // pred_check
          %p229 = pneg %p39
        $region42: #{tpu_custom_call.1} parent=39 // pred_check_branch
          %231 = sbr.rel (%p229) target = $region44
        $region43: #{tpu_custom_call.1} parent=39 // pred_region
          %232 = dma.done [#allocation3], 32
        $region44: #{tpu_custom_call.1} parent=39 // pred_fallthru
          _
        %s233 = sand.u32 %s23, 1
        %s234 = scalar_lea.sflag [#allocation6], %s233
        %s235 = sand.u32 %s73, 1
        %s236 = smul.addr %s235, 8
        %s237 = scalar_lea.vmem [#allocation5], %s236
        // Predicated region
        $region45: #{tpu_custom_call.1} parent=39 // pred_check
          %p238 = pneg %p86
        $region46: #{tpu_custom_call.1} parent=39 // pred_check_branch
          %240 = sbr.rel (%p238) target = $region48
        $region47: #{tpu_custom_call.1} parent=39 // pred_region
          %241 = dma.done %s234, 128
        $region48: #{tpu_custom_call.1} parent=39 // pred_fallthru
          _
        // Predicated region
        $region49: #{tpu_custom_call.1} parent=39 // pred_check
          %p242 = pneg %p107
        $region50: #{tpu_custom_call.1} parent=39 // pred_check_branch
          %244 = sbr.rel (%p242) target = $region52
        $region51: #{tpu_custom_call.1} parent=39 // pred_region
          %245 = dma.done [#allocation6], 192
        $region52: #{tpu_custom_call.1} parent=39 // pred_fallthru
          _
        %p246 = pneg %p39
        %p247 = pneg %p36
        %p248 = pneg %p60
        %p249 = pneg %p57
        %s250 = sand.u32 %s23, 1
        %s251 = scalar_lea.sflag [#allocation6], %s250
        %s252 = sand.u32 %s73, 1
        %s253 = smul.addr %s252, 8
        %s254 = scalar_lea.vmem [#allocation5], %s253
        %p255 = pneg %p86
        %p256 = pneg %p83
        %p257 = pneg %p107
        %p258 = pneg %p104
        %p259 = pneg %p128
        %p260 = pneg %p125
        %p261 = pneg %p154
        %p262 = pneg %p151
        %s263 = sand.u32 %s141, 1
        %s264 = scalar_lea.sflag [#allocation4], %s263
        %s265 = sand.u32 %s141, 1
        %s266 = smul.addr %s265, 8
        %s267 = scalar_lea.vmem [#allocation8], %s266
        %v268 = vld [vmem:[%s237] sm:$0xff]
        %v269 = vld [vmem:[#allocation2] sm:$0x3]
        %v270 = vld [vmem:[%s1] sm:$0x3]
        %vm271 = vcmp.eq.s32.totalorder %v269, 0
        %vm272 = vcmp.eq.s32.totalorder %v269, 15
        %vm273 = vcmp.eq.s32.totalorder %v270, 0
        %vm274 = vcmp.eq.s32.totalorder %v270, 15
        %v276 = vcombine.high %v268, %v268
        %278 = vrot.lane.b32.xlu0 %v268, 1
        %v279 = vpop.permute.xlu0 %278
        %280 = vrot.lane.b32.xlu0 %v276, 1
        %v281 = vpop.permute.xlu0 %280
        %v282 = vlaneseq
        %v283 = vand.u32 %v282, 127
        %vm284 = vcmp.lt.s32.totalorder %v283, 1
        %v285 = vsel %vm284, %v279, %v281
        %v286 = vsel %vm284, %v281, %v279
        %287 = vrot.lane.b32.xlu0 %v268, 127
        %v288 = vpop.permute.xlu0 %287
        %289 = vrot.lane.b32.xlu0 %v276, 127
        %v290 = vpop.permute.xlu0 %289
        %vm291 = vcmp.lt.s32.totalorder %v283, 127
        %v292 = vsel %vm291, %v288, %v290
        %v293 = vsel %vm291, %v290, %v288
        %v294 = vsel %vm271, 1, 0
        %v295 = vlaneseq
        %v296 = vshrl.u32 %v295, 7
        %v297 = vsub.s32 0, %v296
        %v298 = vrot.slane %v294, %v297
        %v299 = vlaneseq
        %v300 = vshrl.u32 %v299, 7
        %v301 = vsub.s32 1, %v300
        %v302 = vrot.slane %v294, %v301
        %vm303 = vcmp.eq.s32.totalorder %v298, 1
        %vm304 = vcmp.eq.s32.totalorder %v302, 1
        %v305 = vsel %vm303, %v292, %v286
        %v306 = vsel %vm304, %v293, %v285
        %v307 = vsel %vm272, 1, 0
        %v308 = vlaneseq
        %v309 = vshrl.u32 %v308, 7
        %v310 = vsub.s32 0, %v309
        %v311 = vrot.slane %v307, %v310
        %v312 = vlaneseq
        %v313 = vshrl.u32 %v312, 7
        %v314 = vsub.s32 1, %v313
        %v315 = vrot.slane %v307, %v314
        %vm316 = vcmp.eq.s32.totalorder %v311, 1
        %vm317 = vcmp.eq.s32.totalorder %v315, 1
        %v318 = vsel %vm316, %v286, %v292
        %v319 = vsel %vm317, %v285, %v293
        %v320 = vcombine.low %v268, %v268
        %vm322 = vcmask 1043456
        %v323 = vsel %vm322, %v305, %v320
        %v324 = vsel %vm322, %v306, %v268
        %325 = vrot.lane.b32.xlu0 %v323, 16
        %v326 = vpop.permute.xlu0 %325
        %327 = vrot.lane.b32.xlu0 %v318, 16
        %v328 = vpop.permute.xlu0 %327
        %329 = vrot.lane.b32.xlu0 %v324, 16
        %v330 = vpop.permute.xlu0 %329
        %331 = vrot.lane.b32.xlu0 %v319, 16
        %v332 = vpop.permute.xlu0 %331
        %vm333 = vcmp.lt.s32.totalorder %v283, 16
        %v334 = vsel %vm333, %v326, %v330
        %v335 = vsel %vm333, %v328, %v332
        %v336 = vsel %vm333, %v330, %v326
        %v337 = vsel %vm333, %v332, %v328
        %338 = vrot.lane.b32.xlu0 %v323, 112
        %v339 = vpop.permute.xlu0 %338
        %340 = vrot.lane.b32.xlu0 %v318, 112
        %v341 = vpop.permute.xlu0 %340
        %342 = vrot.lane.b32.xlu0 %v324, 112
        %v343 = vpop.permute.xlu0 %342
        %344 = vrot.lane.b32.xlu0 %v319, 112
        %v345 = vpop.permute.xlu0 %344
        %vm346 = vcmp.lt.s32.totalorder %v283, 112
        %v347 = vsel %vm346, %v339, %v343
        %v348 = vsel %vm346, %v341, %v345
        %v349 = vsel %vm346, %v343, %v339
        %v350 = vsel %vm346, %v345, %v341
        %v351 = vsel %vm273, 1, 0
        %v352 = vlaneseq
        %v353 = vshrl.u32 %v352, 7
        %v354 = vsub.s32 0, %v353
        %v355 = vrot.slane %v351, %v354
        %v356 = vlaneseq
        %v357 = vshrl.u32 %v356, 7
        %v358 = vsub.s32 1, %v357
        %v359 = vrot.slane %v351, %v358
        %vm360 = vcmp.eq.s32.totalorder %v355, 1
        %vm361 = vcmp.eq.s32.totalorder %v359, 1
        %v362 = vsel %vm360, %v347, %v336
        %v363 = vsel %vm361, %v349, %v334
        %v364 = vsel %vm360, %v348, %v337
        %v365 = vsel %vm361, %v350, %v335
        %v366 = vsel %vm274, 1, 0
        %v367 = vlaneseq
        %v368 = vshrl.u32 %v367, 7
        %v369 = vsub.s32 0, %v368
        %v370 = vrot.slane %v366, %v369
        %v371 = vlaneseq
        %v372 = vshrl.u32 %v371, 7
        %v373 = vsub.s32 1, %v372
        %v374 = vrot.slane %v366, %v373
        %vm375 = vcmp.eq.s32.totalorder %v370, 1
        %vm376 = vcmp.eq.s32.totalorder %v374, 1
        %v377 = vsel %vm375, %v336, %v347
        %v378 = vsel %vm376, %v334, %v349
        %v379 = vsel %vm375, %v337, %v348
        %v380 = vsel %vm376, %v335, %v350
        %v381 = vld [vmem:[#allocation7] sm:$0xf]
        %s382 = scalar_lea.vmem [#allocation7], 4
        %v383 = vld [vmem:[%s382] sm:$0xf]
        %vm384 = vcmask 97280
        %v386 = vsel %vm384, %v383, 0
        %v389 = vsel %vm322, %v318, 0
        %v392 = vsel %vm322, %v319, 0
        %394 = vmatprep.subr.mxu0 %v324
        %395 = vmatpush1.msra.mxu0 %v323
        %396 = vmatprep.subr.mxu0 %v392
        %397 = vmatpush1.msra.mxu0 %v389
        %398 = vmatprep.subr.mxu0 0.0
        %399 = vmatpush1.msra.mxu0 0.0
        %400 = vmatprep.subr.mxu0 0.0
        %401 = vmatpush1.msra.mxu0 0.0
        %402 = vmatprep.subr.mxu0 0.0
        %403 = vmatpush1.msra.mxu0 0.0
        %404 = vmatprep.subr.mxu0 0.0
        %405 = vmatpush1.msra.mxu0 0.0
        %406 = vmatprep.subr.mxu0 0.0
        %407 = vmatpush1.msra.mxu0 0.0
        %408 = vmatprep.subr.mxu0 0.0
        %409 = vmatpush1.msra.mxu0 0.0
        %410 = vmatprep.subr.mxu0 0.0
        %411 = vmatpush1.msra.mxu0 0.0
        %412 = vmatprep.subr.mxu0 0.0
        %413 = vmatpush1.msra.mxu0 0.0
        %414 = vmatprep.subr.mxu0 0.0
        %415 = vmatpush1.msra.mxu0 0.0
        %416 = vmatprep.subr.mxu0 0.0
        %417 = vmatpush1.msra.mxu0 0.0
        %418 = vmatprep.subr.mxu0 0.0
        %419 = vmatpush1.msra.mxu0 0.0
        %420 = vmatprep.subr.mxu0 0.0
        %421 = vmatpush1.msra.mxu0 0.0
        %422 = vmatprep.subr.mxu0 0.0
        %423 = vmatpush1.msra.mxu0 0.0
        %424 = vmatprep.subr.mxu0 0.0
        %425 = vmatpush1.msra.mxu0 0.0
        %426 = vmatprep.subr.mxu0 0.0
        %427 = vmatpush1.msra.mxu0 0.0
        %428 = vmatprep.subr.mxu0 0.0
        %429 = vmatpush1.msra.mxu0 0.0
        %430 = vmatprep.subr.mxu0 0.0
        %431 = vmatpush1.msra.mxu0 0.0
        %432 = vmatprep.subr.mxu0 0.0
        %433 = vmatpush1.msra.mxu0 0.0
        %434 = vmatprep.subr.mxu0 0.0
        %435 = vmatpush1.msra.mxu0 0.0
        %436 = vmatprep.subr.mxu0 0.0
        %437 = vmatpush1.msra.mxu0 0.0
        %438 = vmatprep.subr.mxu0 0.0
        %439 = vmatpush1.msra.mxu0 0.0
        %440 = vmatprep.subr.mxu0 0.0
        %441 = vmatpush1.msra.mxu0 0.0
        %442 = vmatprep.subr.mxu0 0.0
        %443 = vmatpush1.msra.mxu0 0.0
        %444 = vmatprep.subr.mxu0 0.0
        %445 = vmatpush1.msra.mxu0 0.0
        %446 = vmatprep.subr.mxu0 0.0
        %447 = vmatpush1.msra.mxu0 0.0
        %448 = vmatprep.subr.mxu0 0.0
        %449 = vmatpush1.msra.mxu0 0.0
        %450 = vmatprep.subr.mxu0 0.0
        %451 = vmatpush1.msra.mxu0 0.0
        %452 = vmatprep.subr.mxu0 0.0
        %453 = vmatpush1.msra.mxu0 0.0
        %454 = vmatprep.subr.mxu0 0.0
        %455 = vmatpush1.msra.mxu0 0.0
        %456 = vmatprep.subr.mxu0 0.0
        %457 = vmatpush1.msra.mxu0 0.0
        %458 = vmatprep.mubr.f32.mxu0 0.0
        %459 = vmatmul.mubr.f32.gmra.mrb[0].mxu0 %v386
        %v460 = vpop.f32.mrb[0].mxu0
        %v461 = vadd.f32 0.0, %v460
        %v462 = vpop.f32.mrb[0].mxu0
        %v463 = vadd.f32 0.0, %v462
        %464 = vdwg.mxu0
        %v466 = vsel %vm384, %v381, 0
        %v469 = vsel %vm322, %v364, 0
        %v472 = vsel %vm322, %v365, 0
        %474 = vmatprep.subr.mxu0 %v363
        %475 = vmatpush1.msra.mxu0 %v362
        %476 = vmatprep.subr.mxu0 %v472
        %477 = vmatpush1.msra.mxu0 %v469
        %478 = vmatprep.subr.mxu0 0.0
        %479 = vmatpush1.msra.mxu0 0.0
        %480 = vmatprep.subr.mxu0 0.0
        %481 = vmatpush1.msra.mxu0 0.0
        %482 = vmatprep.subr.mxu0 0.0
        %483 = vmatpush1.msra.mxu0 0.0
        %484 = vmatprep.subr.mxu0 0.0
        %485 = vmatpush1.msra.mxu0 0.0
        %486 = vmatprep.subr.mxu0 0.0
        %487 = vmatpush1.msra.mxu0 0.0
        %488 = vmatprep.subr.mxu0 0.0
        %489 = vmatpush1.msra.mxu0 0.0
        %490 = vmatprep.subr.mxu0 0.0
        %491 = vmatpush1.msra.mxu0 0.0
        %492 = vmatprep.subr.mxu0 0.0
        %493 = vmatpush1.msra.mxu0 0.0
        %494 = vmatprep.subr.mxu0 0.0
        %495 = vmatpush1.msra.mxu0 0.0
        %496 = vmatprep.subr.mxu0 0.0
        %497 = vmatpush1.msra.mxu0 0.0
        %498 = vmatprep.subr.mxu0 0.0
        %499 = vmatpush1.msra.mxu0 0.0
        %500 = vmatprep.subr.mxu0 0.0
        %501 = vmatpush1.msra.mxu0 0.0
        %502 = vmatprep.subr.mxu0 0.0
        %503 = vmatpush1.msra.mxu0 0.0
        %504 = vmatprep.subr.mxu0 0.0
        %505 = vmatpush1.msra.mxu0 0.0
        %506 = vmatprep.subr.mxu0 0.0
        %507 = vmatpush1.msra.mxu0 0.0
        %508 = vmatprep.subr.mxu0 0.0
        %509 = vmatpush1.msra.mxu0 0.0
        %510 = vmatprep.subr.mxu0 0.0
        %511 = vmatpush1.msra.mxu0 0.0
        %512 = vmatprep.subr.mxu0 0.0
        %513 = vmatpush1.msra.mxu0 0.0
        %514 = vmatprep.subr.mxu0 0.0
        %515 = vmatpush1.msra.mxu0 0.0
        %516 = vmatprep.subr.mxu0 0.0
        %517 = vmatpush1.msra.mxu0 0.0
        %518 = vmatprep.subr.mxu0 0.0
        %519 = vmatpush1.msra.mxu0 0.0
        %520 = vmatprep.subr.mxu0 0.0
        %521 = vmatpush1.msra.mxu0 0.0
        %522 = vmatprep.subr.mxu0 0.0
        %523 = vmatpush1.msra.mxu0 0.0
        %524 = vmatprep.subr.mxu0 0.0
        %525 = vmatpush1.msra.mxu0 0.0
        %526 = vmatprep.subr.mxu0 0.0
        %527 = vmatpush1.msra.mxu0 0.0
        %528 = vmatprep.subr.mxu0 0.0
        %529 = vmatpush1.msra.mxu0 0.0
        %530 = vmatprep.subr.mxu0 0.0
        %531 = vmatpush1.msra.mxu0 0.0
        %532 = vmatprep.subr.mxu0 0.0
        %533 = vmatpush1.msra.mxu0 0.0
        %534 = vmatprep.subr.mxu0 0.0
        %535 = vmatpush1.msra.mxu0 0.0
        %536 = vmatprep.subr.mxu0 0.0
        %537 = vmatpush1.msra.mxu0 0.0
        %538 = vmatprep.mubr.f32.mxu0 0.0
        %539 = vmatmul.mubr.f32.gmra.mrb[0].mxu0 %v466
        %v540 = vpop.f32.mrb[0].mxu0
        %v541 = vadd.f32 %v461, %v540
        %v542 = vpop.f32.mrb[0].mxu0
        %v543 = vadd.f32 %v463, %v542
        %544 = vdwg.mxu0
        %s545 = scalar_lea.vmem [#allocation7], 8
        %v546 = vld [vmem:[%s545] sm:$0xf]
        %v548 = vsel %vm384, %v546, 0
        %v551 = vsel %vm322, %v379, 0
        %v554 = vsel %vm322, %v380, 0
        %556 = vmatprep.subr.mxu0 %v378
        %557 = vmatpush1.msra.mxu0 %v377
        %558 = vmatprep.subr.mxu0 %v554
        %559 = vmatpush1.msra.mxu0 %v551
        %560 = vmatprep.subr.mxu0 0.0
        %561 = vmatpush1.msra.mxu0 0.0
        %562 = vmatprep.subr.mxu0 0.0
        %563 = vmatpush1.msra.mxu0 0.0
        %564 = vmatprep.subr.mxu0 0.0
        %565 = vmatpush1.msra.mxu0 0.0
        %566 = vmatprep.subr.mxu0 0.0
        %567 = vmatpush1.msra.mxu0 0.0
        %568 = vmatprep.subr.mxu0 0.0
        %569 = vmatpush1.msra.mxu0 0.0
        %570 = vmatprep.subr.mxu0 0.0
        %571 = vmatpush1.msra.mxu0 0.0
        %572 = vmatprep.subr.mxu0 0.0
        %573 = vmatpush1.msra.mxu0 0.0
        %574 = vmatprep.subr.mxu0 0.0
        %575 = vmatpush1.msra.mxu0 0.0
        %576 = vmatprep.subr.mxu0 0.0
        %577 = vmatpush1.msra.mxu0 0.0
        %578 = vmatprep.subr.mxu0 0.0
        %579 = vmatpush1.msra.mxu0 0.0
        %580 = vmatprep.subr.mxu0 0.0
        %581 = vmatpush1.msra.mxu0 0.0
        %582 = vmatprep.subr.mxu0 0.0
        %583 = vmatpush1.msra.mxu0 0.0
        %584 = vmatprep.subr.mxu0 0.0
        %585 = vmatpush1.msra.mxu0 0.0
        %586 = vmatprep.subr.mxu0 0.0
        %587 = vmatpush1.msra.mxu0 0.0
        %588 = vmatprep.subr.mxu0 0.0
        %589 = vmatpush1.msra.mxu0 0.0
        %590 = vmatprep.subr.mxu0 0.0
        %591 = vmatpush1.msra.mxu0 0.0
        %592 = vmatprep.subr.mxu0 0.0
        %593 = vmatpush1.msra.mxu0 0.0
        %594 = vmatprep.subr.mxu0 0.0
        %595 = vmatpush1.msra.mxu0 0.0
        %596 = vmatprep.subr.mxu0 0.0
        %597 = vmatpush1.msra.mxu0 0.0
        %598 = vmatprep.subr.mxu0 0.0
        %599 = vmatpush1.msra.mxu0 0.0
        %600 = vmatprep.subr.mxu0 0.0
        %601 = vmatpush1.msra.mxu0 0.0
        %602 = vmatprep.subr.mxu0 0.0
        %603 = vmatpush1.msra.mxu0 0.0
        %604 = vmatprep.subr.mxu0 0.0
        %605 = vmatpush1.msra.mxu0 0.0
        %606 = vmatprep.subr.mxu0 0.0
        %607 = vmatpush1.msra.mxu0 0.0
        %608 = vmatprep.subr.mxu0 0.0
        %609 = vmatpush1.msra.mxu0 0.0
        %610 = vmatprep.subr.mxu0 0.0
        %611 = vmatpush1.msra.mxu0 0.0
        %612 = vmatprep.subr.mxu0 0.0
        %613 = vmatpush1.msra.mxu0 0.0
        %614 = vmatprep.subr.mxu0 0.0
        %615 = vmatpush1.msra.mxu0 0.0
        %616 = vmatprep.subr.mxu0 0.0
        %617 = vmatpush1.msra.mxu0 0.0
        %618 = vmatprep.subr.mxu0 0.0
        %619 = vmatpush1.msra.mxu0 0.0
        %620 = vmatprep.mubr.f32.mxu0 0.0
        %621 = vmatmul.mubr.f32.gmra.mrb[0].mxu0 %v548
        %v622 = vpop.f32.mrb[0].mxu0
        %v623 = vadd.f32 0.0, %v622
        %v624 = vpop.f32.mrb[0].mxu0
        %v625 = vadd.f32 0.0, %v624
        %626 = vdwg.mxu0
        %v627 = vadd.f32 %v541, %v623
        %v628 = vadd.f32 %v543, %v625
        %v629 = vsel %vm322, %v627, 0.0
        %v630 = vsel %vm322, %v628, 0.0
        %v631 = vadd.f32 %v629, %v630
        %632 = vadd.xlane.f32.xlu0 %v631
        %v633 = vpop.xlane.xlu0 %632
        %v634 = vmul.f32 %v633, 0.00390625
        %v635 = vmul.f32 %v627, %v627
        %v636 = vmul.f32 %v628, %v628
        %v637 = vsel %vm322, %v635, 0.0
        %v638 = vsel %vm322, %v636, 0.0
        %v639 = vadd.f32 %v637, %v638
        %640 = vadd.xlane.f32.xlu0 %v639
        %v641 = vpop.xlane.xlu0 %640
        %v642 = vmul.f32 %v641, 0.00390625
        %v643 = vmul.f32 %v634, %v634
        %v644 = vsub.f32 %v642, %v643
        %v645 = vsub.f32 %v627, %v634
        %v646 = vsub.f32 %v628, %v634
        %v647 = vadd.f32 %v644, 1e-05
        %v648 = vrsqrt.pop %v647
        %v649 = vmul.f32 %v645, %v648
        %v650 = vmul.f32 %v646, %v648
        %v651 = vmax.f32 %v649, 0.0
        %v652 = vmax.f32 %v650, 0.0
        %653 = vrot.lane.b32.xlu0 %v651, 1
        %v654 = vpop.permute.xlu0 %653
        %655 = vrot.lane.b32.xlu0 %v652, 1
        %v656 = vpop.permute.xlu0 %655
        %v657 = vsel %vm284, %v654, %v656
        %v658 = vsel %vm284, %v656, %v654
        %659 = vrot.lane.b32.xlu0 %v651, 127
        %v660 = vpop.permute.xlu0 %659
        %661 = vrot.lane.b32.xlu0 %v652, 127
        %v662 = vpop.permute.xlu0 %661
        %v663 = vsel %vm291, %v660, %v662
        %v664 = vsel %vm291, %v662, %v660
        %v665 = vsel %vm303, %v663, %v658
        %v666 = vsel %vm304, %v664, %v657
        %v667 = vsel %vm316, %v658, %v663
        %v668 = vsel %vm317, %v657, %v664
        %v671 = vrot.slane %v651, 4
        %v672 = vrot.slane %v652, 4
        %v675 = vsel %vm322, %v665, %v671
        %v676 = vsel %vm322, %v666, %v672
        %677 = vrot.lane.b32.xlu0 %v675, 16
        %v678 = vpop.permute.xlu0 %677
        %679 = vrot.lane.b32.xlu0 %v667, 16
        %v680 = vpop.permute.xlu0 %679
        %681 = vrot.lane.b32.xlu0 %v676, 16
        %v682 = vpop.permute.xlu0 %681
        %683 = vrot.lane.b32.xlu0 %v668, 16
        %v684 = vpop.permute.xlu0 %683
        %v685 = vsel %vm333, %v678, %v682
        %v686 = vsel %vm333, %v680, %v684
        %v687 = vsel %vm333, %v682, %v678
        %v688 = vsel %vm333, %v684, %v680
        %689 = vrot.lane.b32.xlu0 %v675, 112
        %v690 = vpop.permute.xlu0 %689
        %691 = vrot.lane.b32.xlu0 %v667, 112
        %v692 = vpop.permute.xlu0 %691
        %693 = vrot.lane.b32.xlu0 %v676, 112
        %v694 = vpop.permute.xlu0 %693
        %695 = vrot.lane.b32.xlu0 %v668, 112
        %v696 = vpop.permute.xlu0 %695
        %v697 = vsel %vm346, %v690, %v694
        %v698 = vsel %vm346, %v692, %v696
        %v699 = vsel %vm346, %v694, %v690
        %v700 = vsel %vm346, %v696, %v692
        %v701 = vsel %vm360, %v697, %v687
        %v702 = vsel %vm361, %v699, %v685
        %v703 = vsel %vm360, %v698, %v688
        %v704 = vsel %vm361, %v700, %v686
        %v705 = vsel %vm375, %v687, %v697
        %v706 = vsel %vm376, %v685, %v699
        %v707 = vsel %vm375, %v688, %v698
        %v708 = vsel %vm376, %v686, %v700
        %v709 = vld [vmem:[%s4] sm:$0xf]
        %s710 = scalar_lea.vmem %s4, 4
        %v711 = vld [vmem:[%s710] sm:$0xf]
        %v713 = vsel %vm384, %v711, 0
        %v716 = vsel %vm322, %v667, 0
        %v719 = vsel %vm322, %v668, 0
        %721 = vmatprep.subr.mxu0 %v676
        %722 = vmatpush1.msra.mxu0 %v675
        %723 = vmatprep.subr.mxu0 %v719
        %724 = vmatpush1.msra.mxu0 %v716
        %725 = vmatprep.subr.mxu0 0.0
        %726 = vmatpush1.msra.mxu0 0.0
        %727 = vmatprep.subr.mxu0 0.0
        %728 = vmatpush1.msra.mxu0 0.0
        %729 = vmatprep.subr.mxu0 0.0
        %730 = vmatpush1.msra.mxu0 0.0
        %731 = vmatprep.subr.mxu0 0.0
        %732 = vmatpush1.msra.mxu0 0.0
        %733 = vmatprep.subr.mxu0 0.0
        %734 = vmatpush1.msra.mxu0 0.0
        %735 = vmatprep.subr.mxu0 0.0
        %736 = vmatpush1.msra.mxu0 0.0
        %737 = vmatprep.subr.mxu0 0.0
        %738 = vmatpush1.msra.mxu0 0.0
        %739 = vmatprep.subr.mxu0 0.0
        %740 = vmatpush1.msra.mxu0 0.0
        %741 = vmatprep.subr.mxu0 0.0
        %742 = vmatpush1.msra.mxu0 0.0
        %743 = vmatprep.subr.mxu0 0.0
        %744 = vmatpush1.msra.mxu0 0.0
        %745 = vmatprep.subr.mxu0 0.0
        %746 = vmatpush1.msra.mxu0 0.0
        %747 = vmatprep.subr.mxu0 0.0
        %748 = vmatpush1.msra.mxu0 0.0
        %749 = vmatprep.subr.mxu0 0.0
        %750 = vmatpush1.msra.mxu0 0.0
        %751 = vmatprep.subr.mxu0 0.0
        %752 = vmatpush1.msra.mxu0 0.0
        %753 = vmatprep.subr.mxu0 0.0
        %754 = vmatpush1.msra.mxu0 0.0
        %755 = vmatprep.subr.mxu0 0.0
        %756 = vmatpush1.msra.mxu0 0.0
        %757 = vmatprep.subr.mxu0 0.0
        %758 = vmatpush1.msra.mxu0 0.0
        %759 = vmatprep.subr.mxu0 0.0
        %760 = vmatpush1.msra.mxu0 0.0
        %761 = vmatprep.subr.mxu0 0.0
        %762 = vmatpush1.msra.mxu0 0.0
        %763 = vmatprep.subr.mxu0 0.0
        %764 = vmatpush1.msra.mxu0 0.0
        %765 = vmatprep.subr.mxu0 0.0
        %766 = vmatpush1.msra.mxu0 0.0
        %767 = vmatprep.subr.mxu0 0.0
        %768 = vmatpush1.msra.mxu0 0.0
        %769 = vmatprep.subr.mxu0 0.0
        %770 = vmatpush1.msra.mxu0 0.0
        %771 = vmatprep.subr.mxu0 0.0
        %772 = vmatpush1.msra.mxu0 0.0
        %773 = vmatprep.subr.mxu0 0.0
        %774 = vmatpush1.msra.mxu0 0.0
        %775 = vmatprep.subr.mxu0 0.0
        %776 = vmatpush1.msra.mxu0 0.0
        %777 = vmatprep.subr.mxu0 0.0
        %778 = vmatpush1.msra.mxu0 0.0
        %779 = vmatprep.subr.mxu0 0.0
        %780 = vmatpush1.msra.mxu0 0.0
        %781 = vmatprep.subr.mxu0 0.0
        %782 = vmatpush1.msra.mxu0 0.0
        %783 = vmatprep.subr.mxu0 0.0
        %784 = vmatpush1.msra.mxu0 0.0
        %785 = vmatprep.mubr.f32.mxu0 0.0
        %786 = vmatmul.mubr.f32.gmra.mrb[0].mxu0 %v713
        %v787 = vpop.f32.mrb[0].mxu0
        %v788 = vadd.f32 0.0, %v787
        %v789 = vpop.f32.mrb[0].mxu0
        %v790 = vadd.f32 0.0, %v789
        %791 = vdwg.mxu0
        %v793 = vsel %vm384, %v709, 0
        %v796 = vsel %vm322, %v703, 0
        %v799 = vsel %vm322, %v704, 0
        %801 = vmatprep.subr.mxu0 %v702
        %802 = vmatpush1.msra.mxu0 %v701
        %803 = vmatprep.subr.mxu0 %v799
        %804 = vmatpush1.msra.mxu0 %v796
        %805 = vmatprep.subr.mxu0 0.0
        %806 = vmatpush1.msra.mxu0 0.0
        %807 = vmatprep.subr.mxu0 0.0
        %808 = vmatpush1.msra.mxu0 0.0
        %809 = vmatprep.subr.mxu0 0.0
        %810 = vmatpush1.msra.mxu0 0.0
        %811 = vmatprep.subr.mxu0 0.0
        %812 = vmatpush1.msra.mxu0 0.0
        %813 = vmatprep.subr.mxu0 0.0
        %814 = vmatpush1.msra.mxu0 0.0
        %815 = vmatprep.subr.mxu0 0.0
        %816 = vmatpush1.msra.mxu0 0.0
        %817 = vmatprep.subr.mxu0 0.0
        %818 = vmatpush1.msra.mxu0 0.0
        %819 = vmatprep.subr.mxu0 0.0
        %820 = vmatpush1.msra.mxu0 0.0
        %821 = vmatprep.subr.mxu0 0.0
        %822 = vmatpush1.msra.mxu0 0.0
        %823 = vmatprep.subr.mxu0 0.0
        %824 = vmatpush1.msra.mxu0 0.0
        %825 = vmatprep.subr.mxu0 0.0
        %826 = vmatpush1.msra.mxu0 0.0
        %827 = vmatprep.subr.mxu0 0.0
        %828 = vmatpush1.msra.mxu0 0.0
        %829 = vmatprep.subr.mxu0 0.0
        %830 = vmatpush1.msra.mxu0 0.0
        %831 = vmatprep.subr.mxu0 0.0
        %832 = vmatpush1.msra.mxu0 0.0
        %833 = vmatprep.subr.mxu0 0.0
        %834 = vmatpush1.msra.mxu0 0.0
        %835 = vmatprep.subr.mxu0 0.0
        %836 = vmatpush1.msra.mxu0 0.0
        %837 = vmatprep.subr.mxu0 0.0
        %838 = vmatpush1.msra.mxu0 0.0
        %839 = vmatprep.subr.mxu0 0.0
        %840 = vmatpush1.msra.mxu0 0.0
        %841 = vmatprep.subr.mxu0 0.0
        %842 = vmatpush1.msra.mxu0 0.0
        %843 = vmatprep.subr.mxu0 0.0
        %844 = vmatpush1.msra.mxu0 0.0
        %845 = vmatprep.subr.mxu0 0.0
        %846 = vmatpush1.msra.mxu0 0.0
        %847 = vmatprep.subr.mxu0 0.0
        %848 = vmatpush1.msra.mxu0 0.0
        %849 = vmatprep.subr.mxu0 0.0
        %850 = vmatpush1.msra.mxu0 0.0
        %851 = vmatprep.subr.mxu0 0.0
        %852 = vmatpush1.msra.mxu0 0.0
        %853 = vmatprep.subr.mxu0 0.0
        %854 = vmatpush1.msra.mxu0 0.0
        %855 = vmatprep.subr.mxu0 0.0
        %856 = vmatpush1.msra.mxu0 0.0
        %857 = vmatprep.subr.mxu0 0.0
        %858 = vmatpush1.msra.mxu0 0.0
        %859 = vmatprep.subr.mxu0 0.0
        %860 = vmatpush1.msra.mxu0 0.0
        %861 = vmatprep.subr.mxu0 0.0
        %862 = vmatpush1.msra.mxu0 0.0
        %863 = vmatprep.subr.mxu0 0.0
        %864 = vmatpush1.msra.mxu0 0.0
        %865 = vmatprep.mubr.f32.mxu0 0.0
        %866 = vmatmul.mubr.f32.gmra.mrb[0].mxu0 %v793
        %v867 = vpop.f32.mrb[0].mxu0
        %v868 = vadd.f32 %v788, %v867
        %v869 = vpop.f32.mrb[0].mxu0
        %v870 = vadd.f32 %v790, %v869
        %871 = vdwg.mxu0
        %s872 = scalar_lea.vmem %s4, 8
        %v873 = vld [vmem:[%s872] sm:$0xf]
        %v875 = vsel %vm384, %v873, 0
        %v878 = vsel %vm322, %v707, 0
        %v881 = vsel %vm322, %v708, 0
        %883 = vmatprep.subr.mxu0 %v706
        %884 = vmatpush1.msra.mxu0 %v705
        %885 = vmatprep.subr.mxu0 %v881
        %886 = vmatpush1.msra.mxu0 %v878
        %887 = vmatprep.subr.mxu0 0.0
        %888 = vmatpush1.msra.mxu0 0.0
        %889 = vmatprep.subr.mxu0 0.0
        %890 = vmatpush1.msra.mxu0 0.0
        %891 = vmatprep.subr.mxu0 0.0
        %892 = vmatpush1.msra.mxu0 0.0
        %893 = vmatprep.subr.mxu0 0.0
        %894 = vmatpush1.msra.mxu0 0.0
        %895 = vmatprep.subr.mxu0 0.0
        %896 = vmatpush1.msra.mxu0 0.0
        %897 = vmatprep.subr.mxu0 0.0
        %898 = vmatpush1.msra.mxu0 0.0
        %899 = vmatprep.subr.mxu0 0.0
        %900 = vmatpush1.msra.mxu0 0.0
        %901 = vmatprep.subr.mxu0 0.0
        %902 = vmatpush1.msra.mxu0 0.0
        %903 = vmatprep.subr.mxu0 0.0
        %904 = vmatpush1.msra.mxu0 0.0
        %905 = vmatprep.subr.mxu0 0.0
        %906 = vmatpush1.msra.mxu0 0.0
        %907 = vmatprep.subr.mxu0 0.0
        %908 = vmatpush1.msra.mxu0 0.0
        %909 = vmatprep.subr.mxu0 0.0
        %910 = vmatpush1.msra.mxu0 0.0
        %911 = vmatprep.subr.mxu0 0.0
        %912 = vmatpush1.msra.mxu0 0.0
        %913 = vmatprep.subr.mxu0 0.0
        %914 = vmatpush1.msra.mxu0 0.0
        %915 = vmatprep.subr.mxu0 0.0
        %916 = vmatpush1.msra.mxu0 0.0
        %917 = vmatprep.subr.mxu0 0.0
        %918 = vmatpush1.msra.mxu0 0.0
        %919 = vmatprep.subr.mxu0 0.0
        %920 = vmatpush1.msra.mxu0 0.0
        %921 = vmatprep.subr.mxu0 0.0
        %922 = vmatpush1.msra.mxu0 0.0
        %923 = vmatprep.subr.mxu0 0.0
        %924 = vmatpush1.msra.mxu0 0.0
        %925 = vmatprep.subr.mxu0 0.0
        %926 = vmatpush1.msra.mxu0 0.0
        %927 = vmatprep.subr.mxu0 0.0
        %928 = vmatpush1.msra.mxu0 0.0
        %929 = vmatprep.subr.mxu0 0.0
        %930 = vmatpush1.msra.mxu0 0.0
        %931 = vmatprep.subr.mxu0 0.0
        %932 = vmatpush1.msra.mxu0 0.0
        %933 = vmatprep.subr.mxu0 0.0
        %934 = vmatpush1.msra.mxu0 0.0
        %935 = vmatprep.subr.mxu0 0.0
        %936 = vmatpush1.msra.mxu0 0.0
        %937 = vmatprep.subr.mxu0 0.0
        %938 = vmatpush1.msra.mxu0 0.0
        %939 = vmatprep.subr.mxu0 0.0
        %940 = vmatpush1.msra.mxu0 0.0
        %941 = vmatprep.subr.mxu0 0.0
        %942 = vmatpush1.msra.mxu0 0.0
        %943 = vmatprep.subr.mxu0 0.0
        %944 = vmatpush1.msra.mxu0 0.0
        %945 = vmatprep.subr.mxu0 0.0
        %946 = vmatpush1.msra.mxu0 0.0
        %947 = vmatprep.mubr.f32.mxu0 0.0
        %948 = vmatmul.mubr.f32.gmra.mrb[0].mxu0 %v875
        %v949 = vpop.f32.mrb[0].mxu0
        %v950 = vadd.f32 0.0, %v949
        %v951 = vpop.f32.mrb[0].mxu0
        %v952 = vadd.f32 0.0, %v951
        %953 = vdwg.mxu0
        %v954 = vadd.f32 %v868, %v950
        %v955 = vadd.f32 %v870, %v952
        %v956 = vsel %vm322, %v954, 0.0
        %v957 = vsel %vm322, %v955, 0.0
        %v958 = vadd.f32 %v956, %v957
        %959 = vadd.xlane.f32.xlu0 %v958
        %v960 = vpop.xlane.xlu0 %959
        %v961 = vmul.f32 %v960, 0.00390625
        %v962 = vmul.f32 %v954, %v954
        %v963 = vmul.f32 %v955, %v955
        %v964 = vsel %vm322, %v962, 0.0
        %v965 = vsel %vm322, %v963, 0.0
        %v966 = vadd.f32 %v964, %v965
        %967 = vadd.xlane.f32.xlu0 %v966
        %v968 = vpop.xlane.xlu0 %967
        %v969 = vmul.f32 %v968, 0.00390625
        %v970 = vmul.f32 %v961, %v961
        %v971 = vsub.f32 %v969, %v970
        %v972 = vsub.f32 %v954, %v961
        %v973 = vsub.f32 %v955, %v961
        %v974 = vadd.f32 %v971, 1e-05
        %v975 = vrsqrt.pop %v974
        %v976 = vmul.f32 %v972, %v975
        %v977 = vmul.f32 %v973, %v975
        %v980 = vcombine.low %v976, %v977
        %v982 = vadd.f32 %v268, %v980
        %983 = vst [vmem:[%s267] sm:$0xff] %v982
        %s984 = sand.u32 %s141, 1
        %s985 = scalar_lea.sflag [#allocation4], %s984
        %s986 = sand.u32 %s141, 1
        %s987 = smul.addr %s986, 8
        %s988 = scalar_lea.vmem [#allocation8], %s987
        // Predicated region
        $region53: #{tpu_custom_call.1} parent=39 // pred_check
          %p989 = pneg %p151
        $region54: #{tpu_custom_call.1} parent=39 // pred_check_branch
          %991 = sbr.rel (%p989) target = $region56
        $region55: #{tpu_custom_call.1} parent=39 // pred_region
          %s993 = ssub.s32 128, 128
          %994 = vsyncadd %s985, %s993
          %s995 = smul.addr %s23, 2
          %s996 = smul.addr %s995, 64
          %s997 = scalar_lea.hbm %s5, %s996
          %s999 = sshll.u32 %s988, 4
          %s1000 = int_to_ptr.vmem [resolvable:$true] %s999
          %1002 = dma.vmem_to_hbm [thread:$0]  %s1000, 128, %s997, %s985
        $region56: #{tpu_custom_call.1} parent=39 // pred_fallthru
          _
      $region40: #{tpu_custom_call.1} parent=5 // pred_fallthru
        _
      %p1003 = scmp.le.s32.totalorder 2, %s18
      // Predicated region
      $region57: #{tpu_custom_call.1} parent=5 // pred_check
        %p1004 = pneg %p1003
      $region58: #{tpu_custom_call.1} parent=5 // pred_check_branch
        %1006 = sbr.rel (%p1004) target = $region60
      $region59: #{tpu_custom_call.1} parent=5 // pred_region
        %s1007 = ssub.s32 %s18, 2
        // Predicated region
        $region61: #{tpu_custom_call.1} parent=59 // pred_check
          %p1008 = pneg %p157
        $region62: #{tpu_custom_call.1} parent=59 // pred_check_branch
          %1010 = sbr.rel (%p1008) target = $region64
        $region63: #{tpu_custom_call.1} parent=59 // pred_region
          %s1011 = sand.u32 %s142, 1
          %s1012 = scalar_lea.sflag [#allocation4], %s1011
          %s1013 = sand.u32 %s142, 1
          %s1014 = smul.addr %s1013, 8
          %s1015 = scalar_lea.vmem [#allocation8], %s1014
          %1016 = dma.done %s1012, 128
        $region64: #{tpu_custom_call.1} parent=59 // pred_fallthru
          _
      $region60: #{tpu_custom_call.1} parent=5 // pred_fallthru
        _
    $region6: #{tpu_custom_call.1} parent=1 // loop_footer
      %s22 = sadd.s32 1, %s18
    $region7: #{tpu_custom_call.1} parent=1 // loop_footer_branch
      %17 = sbr.rel target = $region3
    $region8: #{tpu_custom_call.1} parent=1 // loop_exit
      _
    %1017 = vsyncpa [#allocation3], 1
    %s1018 = scalar_lea.sflag [#allocation3], 1
    %1019 = vsyncpa %s1018, 1
    %1020 = vsyncpa [#allocation6], 1
    %s1021 = scalar_lea.sflag [#allocation6], 1
    %1022 = vsyncpa %s1021, 1
    %1023 = vsyncpa [#allocation4], 1
    %s1024 = scalar_lea.sflag [#allocation4], 1
    %1025 = vsyncpa %s1024, 1

</llo_original>
